<compile_context>
chip_gen: v6e
topology: v6e:2x2x1
jax: 0.10.0
libtpu: 0.0.40
codegen_flags: <defaults>
</compile_context>

<pallas_src>
import jax
import jax.numpy as jnp
from jax import lax
from jax.experimental import pallas as pl
from jax.experimental.pallas import tpu as pltpu


def bidaf_kernel(bias3_ref,                    # SMEM (3,)   [b_c, b_q, b_cq]
                 emb1_ref, emb2_ref,           # VMEM (1,X,H), (1,Y,H)
                 wc_ref, wq_ref, wcq_ref,      # VMEM (1,H) each
                 wred_ref, bred_ref,           # VMEM (4H,O), (1,O)
                 out_ref):                     # VMEM (1,Y,O)
    _, X, H = emb1_ref.shape
    Y = emb2_ref.shape[1]

    e1 = emb1_ref[0]                           # (X, H)
    e2 = emb2_ref[0]                           # (Y, H)
    wc = wc_ref[...]                           # (1, H)
    wq = wq_ref[...]                           # (1, H)
    wcq = wcq_ref[...]                         # (1, H)
    b_c = bias3_ref[0]
    b_q = bias3_ref[1]
    b_cq = bias3_ref[2]

    # Similarity: s[j, i] = w_c.e2[j] + w_q.e1[i] + w_cq.(e2[j]*e1[i]) + biases
    c = jnp.sum(e2 * wc, axis=-1, keepdims=True) + b_c                 # (Y, 1)
    q = jnp.sum(e1 * wq, axis=-1, keepdims=True) + b_q                 # (X, 1)
    # Contract the last (hidden) axis of both operands directly on the MXU;
    # avoids an explicit e1.T relayout.
    xy = lax.dot_general(e2 * wcq, e1,
                         dimension_numbers=(((1,), (1,)), ((), ())),
                         preferred_element_type=jnp.float32) + b_cq    # (Y, X)
    s = xy + c + q.T                                                   # (Y, X)

    # a = softmax(s, axis=-1); y2x = a @ emb1 with the normalization folded
    # into the (Y, H) matmul output (exact divide -- approx recip broke 1e-3).
    s_max = jnp.max(s, axis=-1, keepdims=True)                         # (Y, 1)
    p = jnp.exp(s - s_max)                                             # (Y, X)
    inv_l = 1.0 / jnp.sum(p, axis=-1, keepdims=True)                   # (Y, 1)
    y2x = jnp.dot(p, e1, preferred_element_type=jnp.float32) * inv_l   # (Y, H)

    # b = softmax(max(s, axis=-1)) over y_len; x2y as a broadcast-multiply +
    # sublane reduce (VPU/XLU) instead of a degenerate M=1 MXU matmul.
    mm = jnp.max(s_max)
    bm = jnp.exp(s_max - mm)                                           # (Y, 1)
    b_att = bm / jnp.sum(bm)                                           # (Y, 1)
    x2y = jnp.sum(b_att * e2, axis=0, keepdims=True)                   # (1, H)

    # Reduction layer z @ W_red + b_red without staging z: four accumulating
    # K=H matmuls against static slices of the w_red Ref.
    #   z = [emb2 | y2x | emb2*y2x | emb2*x2y]
    acc = jnp.dot(e2, wred_ref[0 * H:1 * H, :],
                  preferred_element_type=jnp.float32)                  # (Y, O)
    acc += jnp.dot(y2x, wred_ref[1 * H:2 * H, :],
                   preferred_element_type=jnp.float32)
    acc += jnp.dot(e2 * y2x, wred_ref[2 * H:3 * H, :],
                   preferred_element_type=jnp.float32)
    acc += jnp.dot(e2 * x2y, wred_ref[3 * H:4 * H, :],
                   preferred_element_type=jnp.float32)
    out_ref[0] = acc + bred_ref[...]                                   # (Y, O)


def bidaf_forward(emb1, emb2, params):
    """emb1: (B, x_len, H), emb2: (B, y_len, H) -> (B, y_len, O)."""
    B, X, H = emb1.shape
    _, Y, _ = emb2.shape
    O = params["w_red"].shape[1]

    bias3 = jnp.stack([params["b_c"], params["b_q"], params["b_cq"]]).astype(jnp.float32)

    grid_spec = pltpu.PrefetchScalarGridSpec(
        num_scalar_prefetch=0,
        grid=(B,),                                                    # one row / step
        in_specs=[
            pl.BlockSpec(memory_space=pltpu.MemorySpace.SMEM),        # bias3 (3,)
            pl.BlockSpec((1, X, H), lambda b: (b, 0, 0)),             # emb1
            pl.BlockSpec((1, Y, H), lambda b: (b, 0, 0)),             # emb2
            pl.BlockSpec((1, H), lambda b: (0, 0)),                   # w_c
            pl.BlockSpec((1, H), lambda b: (0, 0)),                   # w_q
            pl.BlockSpec((1, H), lambda b: (0, 0)),                   # w_cq
            pl.BlockSpec((4 * H, O), lambda b: (0, 0)),               # w_red
            pl.BlockSpec((1, O), lambda b: (0, 0)),                   # b_red
        ],
        out_specs=pl.BlockSpec((1, Y, O), lambda b: (b, 0, 0)),
    )

    return pl.pallas_call(
        bidaf_kernel,
        out_shape=jax.ShapeDtypeStruct((B, Y, O), jnp.float32),
        grid_spec=grid_spec,
        compiler_params=pltpu.CompilerParams(dimension_semantics=("parallel",)),
    )(bias3, emb1, emb2, params["w_c"], params["w_q"], params["w_cq"],
      params["w_red"], params["b_red"])


def bidaf_ref(emb1, emb2, params):
    """Pure-JAX reference mirroring the PyTorch forward."""
    wc, wq, wcq = params["w_c"][0], params["w_q"][0], params["w_cq"][0]
    b_c, b_q, b_cq = params["b_c"], params["b_q"], params["b_cq"]
    c = jnp.einsum("byh,h->by", emb2, wc) + b_c
    q = jnp.einsum("bxh,h->bx", emb1, wq) + b_q
    xy = jnp.einsum("byh,bxh->byx", emb2 * wcq, emb1) + b_cq
    s = xy + c[:, :, None] + q[:, None, :]
    a = jax.nn.softmax(s, axis=2)
    y2x = jnp.einsum("byx,bxh->byh", a, emb1)
    b = jax.nn.softmax(jnp.max(s, axis=2), axis=1)
    x2y = jnp.einsum("by,byh->bh", b, emb2)
    z = jnp.concatenate([emb2, y2x, emb2 * y2x, emb2 * x2y[:, None, :]], axis=-1)
    return jnp.einsum("byf,fo->byo", z, params["w_red"]) + params["b_red"][0]


def init_params(key, hidden_size, output_size):
    """Deterministic init matching reset_params(): kaiming_normal weights, zero biases."""
    k1, k2, k3, k4 = jax.random.split(key, 4)

    def kaiming(k, fan_in, shape):
        return (jnp.sqrt(2.0 / fan_in) * jax.random.normal(k, shape)).astype(jnp.float32)

    return {
        "w_c":   kaiming(k1, hidden_size, (1, hidden_size)),
        "w_q":   kaiming(k2, hidden_size, (1, hidden_size)),
        "w_cq":  kaiming(k3, hidden_size, (1, hidden_size)),
        # PyTorch Linear(4H, O) weight is (O, 4H); stored transposed as (4H, O).
        "w_red": kaiming(k4, 4 * hidden_size, (4 * hidden_size, output_size)),
        "b_c":   jnp.float32(0.0),
        "b_q":   jnp.float32(0.0),
        "b_cq":  jnp.float32(0.0),
        "b_red": jnp.zeros((1, output_size), jnp.float32),
    }


if __name__ == "__main__":
    B, X_LEN, Y_LEN, HIDDEN, OUT = 2, 8, 16, 128, 128

    key = jax.random.PRNGKey(0)
    k_e1, k_e2, k_p = jax.random.split(key, 3)
    emb1 = jax.random.normal(k_e1, (B, X_LEN, HIDDEN), jnp.float32)
    emb2 = jax.random.normal(k_e2, (B, Y_LEN, HIDDEN), jnp.float32)
    params = init_params(k_p, HIDDEN, OUT)

    out = jax.block_until_ready(bidaf_forward(emb1, emb2, params))
    ref = jax.block_until_ready(bidaf_ref(emb1, emb2, params))

    assert out.shape == (B, Y_LEN, OUT), out.shape
    assert jnp.allclose(out, ref, atol=1e-3, rtol=1e-3), float(jnp.max(jnp.abs(out - ref)))
    print("KERNEL_OK")
</pallas_src>

<mosaic_0001>
module attributes {stable_mosaic.version = 11 : i64} {
  func.func @bidaf_kernel(%arg0: i32, %arg1: memref<3xf32, #tpu.memory_space<smem>>, %arg2: memref<1x8x128xf32, #tpu.memory_space<vmem>>, %arg3: memref<1x16x128xf32, #tpu.memory_space<vmem>>, %arg4: memref<1x128xf32, #tpu.memory_space<vmem>>, %arg5: memref<1x128xf32, #tpu.memory_space<vmem>>, %arg6: memref<1x128xf32, #tpu.memory_space<vmem>>, %arg7: memref<512x128xf32, #tpu.memory_space<vmem>>, %arg8: memref<1x128xf32, #tpu.memory_space<vmem>>, %arg9: memref<1x16x128xf32, #tpu.memory_space<vmem>>) attributes {dimension_semantics = [#tpu.dimension_semantics<parallel>], iteration_bounds = array<i64: 2>, scalar_prefetch = 0 : i64, scratch_operands = 0 : i64, tpu.core_type = #tpu.core_type<tc>, window_params = [{transform_indices = @transform_0, window_bounds = array<i64: 3>}, {transform_indices = @transform_1, window_bounds = array<i64: 1, 8, 128>}, {transform_indices = @transform_2, window_bounds = array<i64: 1, 16, 128>}, {pipeline_mode = #tpu.pipeline_mode<synchronous>, transform_indices = @transform_3, window_bounds = array<i64: 1, 128>}, {pipeline_mode = #tpu.pipeline_mode<synchronous>, transform_indices = @transform_4, window_bounds = array<i64: 1, 128>}, {pipeline_mode = #tpu.pipeline_mode<synchronous>, transform_indices = @transform_5, window_bounds = array<i64: 1, 128>}, {pipeline_mode = #tpu.pipeline_mode<synchronous>, transform_indices = @transform_6, window_bounds = array<i64: 512, 128>}, {pipeline_mode = #tpu.pipeline_mode<synchronous>, transform_indices = @transform_7, window_bounds = array<i64: 1, 128>}, {transform_indices = @transform_8, window_bounds = array<i64: 1, 16, 128>}]} {
    %c0 = arith.constant 0 : index
    %c0_0 = arith.constant 0 : index
    %c0_1 = arith.constant 0 : index
    %0 = vector.load %arg2[%c0, %c0_0, %c0_1] : memref<1x8x128xf32, #tpu.memory_space<vmem>>, vector<1x8x128xf32>
    %1 = vector.shape_cast %0 : vector<1x8x128xf32> to vector<8x128xf32>
    %c0_2 = arith.constant 0 : index
    %c0_3 = arith.constant 0 : index
    %c0_4 = arith.constant 0 : index
    %2 = vector.load %arg3[%c0_2, %c0_3, %c0_4] : memref<1x16x128xf32, #tpu.memory_space<vmem>>, vector<1x16x128xf32>
    %3 = vector.shape_cast %2 : vector<1x16x128xf32> to vector<16x128xf32>
    %c0_5 = arith.constant 0 : index
    %c0_6 = arith.constant 0 : index
    %4 = vector.load %arg4[%c0_5, %c0_6] : memref<1x128xf32, #tpu.memory_space<vmem>>, vector<1x128xf32>
    %c0_7 = arith.constant 0 : index
    %c0_8 = arith.constant 0 : index
    %5 = vector.load %arg5[%c0_7, %c0_8] : memref<1x128xf32, #tpu.memory_space<vmem>>, vector<1x128xf32>
    %c0_9 = arith.constant 0 : index
    %c0_10 = arith.constant 0 : index
    %6 = vector.load %arg6[%c0_9, %c0_10] : memref<1x128xf32, #tpu.memory_space<vmem>>, vector<1x128xf32>
    %c0_11 = arith.constant 0 : index
    %7 = memref.load %arg1[%c0_11] : memref<3xf32, #tpu.memory_space<smem>>
    %c1 = arith.constant 1 : index
    %8 = memref.load %arg1[%c1] : memref<3xf32, #tpu.memory_space<smem>>
    %c2 = arith.constant 2 : index
    %9 = memref.load %arg1[%c2] : memref<3xf32, #tpu.memory_space<smem>>
    %10 = vector.broadcast %4 : vector<1x128xf32> to vector<16x128xf32>
    %11 = arith.mulf %3, %10 : vector<16x128xf32>
    %cst = arith.constant dense<0.000000e+00> : vector<16xf32>
    %12 = vector.multi_reduction <add>, %11, %cst [1] : vector<16x128xf32> to vector<16xf32>
    %13 = vector.shape_cast %12 : vector<16xf32> to vector<16x1xf32>
    %14 = vector.broadcast %7 : f32 to vector<16x1xf32>
    %15 = arith.addf %13, %14 : vector<16x1xf32>
    %16 = vector.broadcast %5 : vector<1x128xf32> to vector<8x128xf32>
    %17 = arith.mulf %1, %16 : vector<8x128xf32>
    %cst_12 = arith.constant dense<0.000000e+00> : vector<8xf32>
    %18 = vector.multi_reduction <add>, %17, %cst_12 [1] : vector<8x128xf32> to vector<8xf32>
    %19 = vector.shape_cast %18 : vector<8xf32> to vector<8x1xf32>
    %20 = vector.broadcast %8 : f32 to vector<8x1xf32>
    %21 = arith.addf %19, %20 : vector<8x1xf32>
    %22 = vector.broadcast %6 : vector<1x128xf32> to vector<16x128xf32>
    %23 = arith.mulf %3, %22 : vector<16x128xf32>
    %cst_13 = arith.constant dense<0.000000e+00> : vector<16x8xf32>
    %24 = tpu.matmul %23, %1, %cst_13 {dimension_numbers = #tpu.dot_dimension_numbers<[1], [1], [0], [0], [0, 0, 1, 0], [], []>} : vector<16x128xf32>, vector<8x128xf32>, vector<16x8xf32> -> vector<16x8xf32>
    %25 = vector.broadcast %9 : f32 to vector<16x8xf32>
    %26 = arith.addf %24, %25 : vector<16x8xf32>
    %27 = vector.broadcast %15 : vector<16x1xf32> to vector<16x8xf32>
    %28 = arith.addf %26, %27 : vector<16x8xf32>
    %29 = tpu.transpose %21, [1, 0] : vector<8x1xf32> -> vector<1x8xf32>
    %30 = vector.broadcast %29 : vector<1x8xf32> to vector<16x8xf32>
    %31 = arith.addf %28, %30 : vector<16x8xf32>
    %cst_14 = arith.constant dense<0xFF800000> : vector<16xf32>
    %32 = vector.multi_reduction <maximumf>, %31, %cst_14 [1] : vector<16x8xf32> to vector<16xf32>
    %33 = vector.shape_cast %32 : vector<16xf32> to vector<16x1xf32>
    %34 = vector.broadcast %33 : vector<16x1xf32> to vector<16x8xf32>
    %35 = arith.subf %31, %34 : vector<16x8xf32>
    %36 = math.exp %35 : vector<16x8xf32>
    %cst_15 = arith.constant dense<0.000000e+00> : vector<16xf32>
    %37 = vector.multi_reduction <add>, %36, %cst_15 [1] : vector<16x8xf32> to vector<16xf32>
    %38 = vector.shape_cast %37 : vector<16xf32> to vector<16x1xf32>
    %cst_16 = arith.constant 1.000000e+00 : f32
    %39 = vector.broadcast %cst_16 : f32 to vector<16x1xf32>
    %40 = arith.divf %39, %38 : vector<16x1xf32>
    %cst_17 = arith.constant dense<0.000000e+00> : vector<16x128xf32>
    %41 = tpu.matmul %36, %1, %cst_17 {dimension_numbers = #tpu.dot_dimension_numbers<[1], [0], [0], [1], [0, 0, 1, 1], [], []>} : vector<16x8xf32>, vector<8x128xf32>, vector<16x128xf32> -> vector<16x128xf32>
    %42 = vector.broadcast %40 : vector<16x1xf32> to vector<16x128xf32>
    %43 = arith.mulf %41, %42 : vector<16x128xf32>
    %44 = vector.shape_cast %33 : vector<16x1xf32> to vector<1x16x1xf32>
    %cst_18 = arith.constant dense<0xFF800000> : vector<1xf32>
    %45 = vector.multi_reduction <maximumf>, %44, %cst_18 [1, 2] : vector<1x16x1xf32> to vector<1xf32>
    %46 = vector.shape_cast %45 : vector<1xf32> to vector<1x1x1xf32>
    %47 = vector.extract %46[0, 0, 0] : f32 from vector<1x1x1xf32>
    %48 = vector.broadcast %47 : f32 to vector<16x1xf32>
    %49 = arith.subf %33, %48 : vector<16x1xf32>
    %50 = math.exp %49 : vector<16x1xf32>
    %51 = vector.shape_cast %50 : vector<16x1xf32> to vector<1x16x1xf32>
    %cst_19 = arith.constant dense<0.000000e+00> : vector<1xf32>
    %52 = vector.multi_reduction <add>, %51, %cst_19 [1, 2] : vector<1x16x1xf32> to vector<1xf32>
    %53 = vector.shape_cast %52 : vector<1xf32> to vector<1x1x1xf32>
    %54 = vector.extract %53[0, 0, 0] : f32 from vector<1x1x1xf32>
    %55 = vector.broadcast %54 : f32 to vector<16x1xf32>
    %56 = arith.divf %50, %55 : vector<16x1xf32>
    %57 = vector.broadcast %56 : vector<16x1xf32> to vector<16x128xf32>
    %58 = arith.mulf %57, %3 : vector<16x128xf32>
    %cst_20 = arith.constant dense<0.000000e+00> : vector<128xf32>
    %59 = vector.multi_reduction <add>, %58, %cst_20 [0] : vector<16x128xf32> to vector<128xf32>
    %60 = vector.shape_cast %59 : vector<128xf32> to vector<1x128xf32>
    %c0_21 = arith.constant 0 : index
    %c0_22 = arith.constant 0 : index
    %61 = vector.load %arg7[%c0_21, %c0_22] : memref<512x128xf32, #tpu.memory_space<vmem>>, vector<128x128xf32>
    %cst_23 = arith.constant dense<0.000000e+00> : vector<16x128xf32>
    %62 = tpu.matmul %3, %61, %cst_23 {dimension_numbers = #tpu.dot_dimension_numbers<[1], [0], [0], [1], [0, 0, 1, 1], [], []>} : vector<16x128xf32>, vector<128x128xf32>, vector<16x128xf32> -> vector<16x128xf32>
    %c128 = arith.constant 128 : index
    %c0_24 = arith.constant 0 : index
    %63 = vector.load %arg7[%c128, %c0_24] : memref<512x128xf32, #tpu.memory_space<vmem>>, vector<128x128xf32>
    %cst_25 = arith.constant dense<0.000000e+00> : vector<16x128xf32>
    %64 = tpu.matmul %43, %63, %cst_25 {dimension_numbers = #tpu.dot_dimension_numbers<[1], [0], [0], [1], [0, 0, 1, 1], [], []>} : vector<16x128xf32>, vector<128x128xf32>, vector<16x128xf32> -> vector<16x128xf32>
    %65 = arith.addf %62, %64 : vector<16x128xf32>
    %66 = arith.mulf %3, %43 : vector<16x128xf32>
    %c256 = arith.constant 256 : index
    %c0_26 = arith.constant 0 : index
    %67 = vector.load %arg7[%c256, %c0_26] : memref<512x128xf32, #tpu.memory_space<vmem>>, vector<128x128xf32>
    %cst_27 = arith.constant dense<0.000000e+00> : vector<16x128xf32>
    %68 = tpu.matmul %66, %67, %cst_27 {dimension_numbers = #tpu.dot_dimension_numbers<[1], [0], [0], [1], [0, 0, 1, 1], [], []>} : vector<16x128xf32>, vector<128x128xf32>, vector<16x128xf32> -> vector<16x128xf32>
    %69 = arith.addf %65, %68 : vector<16x128xf32>
    %70 = vector.broadcast %60 : vector<1x128xf32> to vector<16x128xf32>
    %71 = arith.mulf %3, %70 : vector<16x128xf32>
    %c384 = arith.constant 384 : index
    %c0_28 = arith.constant 0 : index
    %72 = vector.load %arg7[%c384, %c0_28] : memref<512x128xf32, #tpu.memory_space<vmem>>, vector<128x128xf32>
    %cst_29 = arith.constant dense<0.000000e+00> : vector<16x128xf32>
    %73 = tpu.matmul %71, %72, %cst_29 {dimension_numbers = #tpu.dot_dimension_numbers<[1], [0], [0], [1], [0, 0, 1, 1], [], []>} : vector<16x128xf32>, vector<128x128xf32>, vector<16x128xf32> -> vector<16x128xf32>
    %74 = arith.addf %69, %73 : vector<16x128xf32>
    %c0_30 = arith.constant 0 : index
    %c0_31 = arith.constant 0 : index
    %75 = vector.load %arg8[%c0_30, %c0_31] : memref<1x128xf32, #tpu.memory_space<vmem>>, vector<1x128xf32>
    %76 = vector.broadcast %75 : vector<1x128xf32> to vector<16x128xf32>
    %77 = arith.addf %74, %76 : vector<16x128xf32>
    %c0_32 = arith.constant 0 : index
    %c0_33 = arith.constant 0 : index
    %c0_34 = arith.constant 0 : index
    %78 = vector.load %arg9[%c0_32, %c0_33, %c0_34] : memref<1x16x128xf32, #tpu.memory_space<vmem>>, vector<1x16x128xf32>
    %79 = vector.shape_cast %78 : vector<1x16x128xf32> to vector<16x128xf32>
    %80 = vector.shape_cast %77 : vector<16x128xf32> to vector<1x16x128xf32>
    tpu.vector_store %arg9[%c0_32, %c0_33, %c0_34], %80 {strides = array<i32>} : memref<1x16x128xf32, #tpu.memory_space<vmem>>, vector<1x16x128xf32>,
    return
  }
  func.func @transform_0(%arg0: i32) -> i32 {
    %c0_i32 = arith.constant 0 : i32
    %c0_i32_0 = arith.constant 0 : i32
    return %c0_i32 : i32
  }
  func.func @transform_1(%arg0: i32) -> (i32, i32, i32) {
    %c0_i32 = arith.constant 0 : i32
    %c0_i32_0 = arith.constant 0 : i32
    %c0_i32_1 = arith.constant 0 : i32
    return %arg0, %c0_i32, %c0_i32_0 : i32, i32, i32
  }
  func.func @transform_2(%arg0: i32) -> (i32, i32, i32) {
    %c0_i32 = arith.constant 0 : i32
    %c0_i32_0 = arith.constant 0 : i32
    %c0_i32_1 = arith.constant 0 : i32
    return %arg0, %c0_i32, %c0_i32_0 : i32, i32, i32
  }
  func.func @transform_3(%arg0: i32) -> (i32, i32) {
    %c0_i32 = arith.constant 0 : i32
    %c0_i32_0 = arith.constant 0 : i32
    %c0_i32_1 = arith.constant 0 : i32
    return %c0_i32, %c0_i32_0 : i32, i32
  }
  func.func @transform_4(%arg0: i32) -> (i32, i32) {
    %c0_i32 = arith.constant 0 : i32
    %c0_i32_0 = arith.constant 0 : i32
    %c0_i32_1 = arith.constant 0 : i32
    return %c0_i32, %c0_i32_0 : i32, i32
  }
  func.func @transform_5(%arg0: i32) -> (i32, i32) {
    %c0_i32 = arith.constant 0 : i32
    %c0_i32_0 = arith.constant 0 : i32
    %c0_i32_1 = arith.constant 0 : i32
    return %c0_i32, %c0_i32_0 : i32, i32
  }
  func.func @transform_6(%arg0: i32) -> (i32, i32) {
    %c0_i32 = arith.constant 0 : i32
    %c0_i32_0 = arith.constant 0 : i32
    %c0_i32_1 = arith.constant 0 : i32
    return %c0_i32, %c0_i32_0 : i32, i32
  }
  func.func @transform_7(%arg0: i32) -> (i32, i32) {
    %c0_i32 = arith.constant 0 : i32
    %c0_i32_0 = arith.constant 0 : i32
    %c0_i32_1 = arith.constant 0 : i32
    return %c0_i32, %c0_i32_0 : i32, i32
  }
  func.func @transform_8(%arg0: i32) -> (i32, i32, i32) {
    %c0_i32 = arith.constant 0 : i32
    %c0_i32_0 = arith.constant 0 : i32
    %c0_i32_1 = arith.constant 0 : i32
    return %arg0, %c0_i32, %c0_i32_0 : i32, i32, i32
  }
}

</mosaic_0001>

<llo_original>
// kernel: tpu_custom_call.1
$region0: #{tpu_custom_call.1}
  #allocation0 [shape = 'u32[]', space=smem, size = 0x4, offset = 0x4, fixed_abs, tag = 'smem constant byte address 0x4 - core index']
  #allocation1 [shape = 'u32[144,128]{1,0:T(1,128)}', space=vmem, size = 0x12000, scoped, tag = 'internal scratch']
  %s0 = inlined_call_operand.hbm [shape: f32[3], index: 0, kind: input, shape index: {}]
  %s1 = inlined_call_operand.hbm [shape: f32[2,8,128], index: 1, kind: input, shape index: {}]
  %s2 = inlined_call_operand.hbm [shape: f32[2,16,128], index: 2, kind: input, shape index: {}]
  %s3 = inlined_call_operand.vmem [shape: f32[1,128], index: 3, kind: input, shape index: {}]
  %s4 = inlined_call_operand.vmem [shape: f32[1,128], index: 4, kind: input, shape index: {}]
  %s5 = inlined_call_operand.vmem [shape: f32[1,128], index: 5, kind: input, shape index: {}]
  %s6 = inlined_call_operand.hbm [shape: f32[512,128], index: 6, kind: input, shape index: {}]
  %s7 = inlined_call_operand.vmem [shape: f32[1,128], index: 7, kind: input, shape index: {}]
  %s8 = inlined_call_operand.hbm [shape: f32[2,16,128], index: 8, kind: output, shape index: {}]
  %s9 = sld [smem:[#allocation0]]
  $region81: #{tpu_custom_call.1} parent=0
    _
  %s11 = ssub.s32 1, %s9
  %s12 = scalar_select 0, %s11, %s9
  $region1: #{tpu_custom_call.1} parent=0
    #allocation2 [shape = 'u8[512]{0}', space=smem, size = 0x200, scoped, tag = 'input window, operand 0, single buffered']
    #allocation3 [shape = 's32[2]{0}', space=sflag, size = 0x8, scoped, tag = 'scoped memory for tpu_custom_call.1']
    #allocation4 [shape = 's32[2]{0}', space=sflag, size = 0x8, scoped, tag = 'scoped memory for tpu_custom_call.1']
    #allocation5 [shape = 's32[2]{0}', space=sflag, size = 0x8, scoped, tag = 'scoped memory for tpu_custom_call.1']
    #allocation6 [shape = 'u8[8192]{0}', space=vmem, size = 0x2000, scoped, tag = 'input window, operand 1']
    #allocation7 [shape = 'u8[16384]{0}', space=vmem, size = 0x4000, scoped, tag = 'input window, operand 2']
    #allocation8 [shape = 's32[2]{0}', space=sflag, size = 0x8, scoped, tag = 'scoped memory for tpu_custom_call.1']
    #allocation9 [shape = 'u8[262144]{0}', space=vmem, size = 0x40000, scoped, tag = 'input window, operand 6, single buffered']
    #allocation10 [shape = 'u8[16384]{0}', space=vmem, size = 0x4000, scoped, tag = 'output window, operand 0']
    %13 = vsyncpa [#allocation5], 0
    %14 = vsyncpa [#allocation3], 0
    %s15 = scalar_lea.sflag [#allocation3], 1
    %16 = vsyncpa %s15, 0
    %17 = vsyncpa [#allocation8], 0
    %s18 = scalar_lea.sflag [#allocation8], 1
    %19 = vsyncpa %s18, 0
    %20 = vsyncpa [#allocation4], 0
    %s21 = scalar_lea.sflag [#allocation4], 1
    %22 = vsyncpa %s21, 0
    loop: start=0, step=1, limit=4
    $region2: #{tpu_custom_call.1} parent=1 // loop_pre_header
      _
    $region3: #{tpu_custom_call.1} parent=1 // loop_header
      %s24 = sphi 0, %s28
      %p25 = scmp.ge.s32.totalorder %s24, 4
      %s32 = sphi 0, %s32
      %s34 = sphi 0, %s32
      %s35 = sphi 0, %s34
      %s49 = sphi 0, %s35
      %s55 = sphi 0, %s57
      %s58 = sphi 0, %s55
      %s59 = sphi 0, %s58
      %s75 = sphi 0, %s59
      %s81 = sphi 0, %s83
      %s84 = sphi 0, %s81
      %s85 = sphi 0, %s84
      %s101 = sphi 0, %s85
      %s105 = sphi 0, %s105
      %s107 = sphi 0, %s105
      %s108 = sphi 0, %s107
      %s122 = sphi 0, %s108
      %s126 = sphi 0, %s126
      %s128 = sphi 0, %s126
      %s129 = sphi 0, %s128
      %s143 = sphi 0, %s129
      %s147 = sphi 0, %s147
      %s149 = sphi 0, %s147
      %s150 = sphi 0, %s149
      %s164 = sphi 0, %s150
      %s168 = sphi 0, %s168
      %s170 = sphi 0, %s168
      %s171 = sphi 0, %s170
      %s185 = sphi 0, %s171
      %s189 = sphi 0, %s189
      %s191 = sphi 0, %s189
      %s192 = sphi 0, %s191
      %s206 = sphi 0, %s192
      %s212 = sphi 0, %s214
      %s215 = sphi 0, %s212
      %s216 = sphi 0, %s215
      %s232 = sphi 0, %s216
    $region4: #{tpu_custom_call.1} parent=1 // loop_header_branch
      %27 = sbr.rel (%p25) target = $region8
    $region5: #{tpu_custom_call.1} parent=1 // loop_body
      %s29 = ssub.s32 %s24, 1
      %s30 = ssub.s32 %s24, 2
      %s31 = sadd.s32 %s24, 1
      %s33 = sadd.s32 %s32, 1
      %p36 = scmp.eq.s32.totalorder %s24, 1
      %p37 = scmp.ne.s32.totalorder %s32, %s34
      %p38 = scmp.eq.s32.totalorder %s24, 0
      %p39 = por %p37, %p38
      %p40 = scmp.ne.s32.totalorder %s32, %s34
      %p41 = scmp.eq.s32.totalorder %s29, 1
      %p42 = por %p40, %p41
      %p43 = scmp.ne.s32.totalorder %s34, %s35
      %p44 = scmp.eq.s32.totalorder %s29, 0
      %p45 = por %p43, %p44
      %p46 = scmp.ne.s32.totalorder %s34, %s35
      %p47 = scmp.eq.s32.totalorder %s30, 1
      %p48 = por %p46, %p47
      %p50 = scmp.ne.s32.totalorder %s35, %s49
      %p51 = scmp.eq.s32.totalorder %s30, 0
      %p52 = por %p50, %p51
      %s53 = ssub.s32 %s24, %s31
      %p54 = scmp.eq.s32.totalorder %s53, 0
      %s56 = sadd.s32 %s55, 1
      %s57 = scalar_select %p54, %s55, %s56
      %p60 = pneg %p54
      %p61 = scmp.eq.s32.totalorder %s24, 1
      %p62 = por %p60, %p61
      %p63 = scmp.ne.s32.totalorder %s55, %s58
      %p64 = scmp.eq.s32.totalorder %s24, 0
      %p65 = por %p63, %p64
      %p66 = scmp.ne.s32.totalorder %s55, %s58
      %p67 = scmp.eq.s32.totalorder %s29, 1
      %p68 = por %p66, %p67
      %p69 = scmp.ne.s32.totalorder %s58, %s59
      %p70 = scmp.eq.s32.totalorder %s29, 0
      %p71 = por %p69, %p70
      %p72 = scmp.ne.s32.totalorder %s58, %s59
      %p73 = scmp.eq.s32.totalorder %s30, 1
      %p74 = por %p72, %p73
      %p76 = scmp.ne.s32.totalorder %s59, %s75
      %p77 = scmp.eq.s32.totalorder %s30, 0
      %p78 = por %p76, %p77
      %s79 = ssub.s32 %s24, %s31
      %p80 = scmp.eq.s32.totalorder %s79, 0
      %s82 = sadd.s32 %s81, 1
      %s83 = scalar_select %p80, %s81, %s82
      %p86 = pneg %p80
      %p87 = scmp.eq.s32.totalorder %s24, 1
      %p88 = por %p86, %p87
      %p89 = scmp.ne.s32.totalorder %s81, %s84
      %p90 = scmp.eq.s32.totalorder %s24, 0
      %p91 = por %p89, %p90
      %p92 = scmp.ne.s32.totalorder %s81, %s84
      %p93 = scmp.eq.s32.totalorder %s29, 1
      %p94 = por %p92, %p93
      %p95 = scmp.ne.s32.totalorder %s84, %s85
      %p96 = scmp.eq.s32.totalorder %s29, 0
      %p97 = por %p95, %p96
      %p98 = scmp.ne.s32.totalorder %s84, %s85
      %p99 = scmp.eq.s32.totalorder %s30, 1
      %p100 = por %p98, %p99
      %p102 = scmp.ne.s32.totalorder %s85, %s101
      %p103 = scmp.eq.s32.totalorder %s30, 0
      %p104 = por %p102, %p103
      %s106 = sadd.s32 %s105, 1
      %p109 = scmp.eq.s32.totalorder %s24, 1
      %p110 = scmp.ne.s32.totalorder %s105, %s107
      %p111 = scmp.eq.s32.totalorder %s24, 0
      %p112 = por %p110, %p111
      %p113 = scmp.ne.s32.totalorder %s105, %s107
      %p114 = scmp.eq.s32.totalorder %s29, 1
      %p115 = por %p113, %p114
      %p116 = scmp.ne.s32.totalorder %s107, %s108
      %p117 = scmp.eq.s32.totalorder %s29, 0
      %p118 = por %p116, %p117
      %p119 = scmp.ne.s32.totalorder %s107, %s108
      %p120 = scmp.eq.s32.totalorder %s30, 1
      %p121 = por %p119, %p120
      %p123 = scmp.ne.s32.totalorder %s108, %s122
      %p124 = scmp.eq.s32.totalorder %s30, 0
      %p125 = por %p123, %p124
      %s127 = sadd.s32 %s126, 1
      %p130 = scmp.eq.s32.totalorder %s24, 1
      %p131 = scmp.ne.s32.totalorder %s126, %s128
      %p132 = scmp.eq.s32.totalorder %s24, 0
      %p133 = por %p131, %p132
      %p134 = scmp.ne.s32.totalorder %s126, %s128
      %p135 = scmp.eq.s32.totalorder %s29, 1
      %p136 = por %p134, %p135
      %p137 = scmp.ne.s32.totalorder %s128, %s129
      %p138 = scmp.eq.s32.totalorder %s29, 0
      %p139 = por %p137, %p138
      %p140 = scmp.ne.s32.totalorder %s128, %s129
      %p141 = scmp.eq.s32.totalorder %s30, 1
      %p142 = por %p140, %p141
      %p144 = scmp.ne.s32.totalorder %s129, %s143
      %p145 = scmp.eq.s32.totalorder %s30, 0
      %p146 = por %p144, %p145
      %s148 = sadd.s32 %s147, 1
      %p151 = scmp.eq.s32.totalorder %s24, 1
      %p152 = scmp.ne.s32.totalorder %s147, %s149
      %p153 = scmp.eq.s32.totalorder %s24, 0
      %p154 = por %p152, %p153
      %p155 = scmp.ne.s32.totalorder %s147, %s149
      %p156 = scmp.eq.s32.totalorder %s29, 1
      %p157 = por %p155, %p156
      %p158 = scmp.ne.s32.totalorder %s149, %s150
      %p159 = scmp.eq.s32.totalorder %s29, 0
      %p160 = por %p158, %p159
      %p161 = scmp.ne.s32.totalorder %s149, %s150
      %p162 = scmp.eq.s32.totalorder %s30, 1
      %p163 = por %p161, %p162
      %p165 = scmp.ne.s32.totalorder %s150, %s164
      %p166 = scmp.eq.s32.totalorder %s30, 0
      %p167 = por %p165, %p166
      %s169 = sadd.s32 %s168, 1
      %p172 = scmp.eq.s32.totalorder %s24, 1
      %p173 = scmp.ne.s32.totalorder %s168, %s170
      %p174 = scmp.eq.s32.totalorder %s24, 0
      %p175 = por %p173, %p174
      %p176 = scmp.ne.s32.totalorder %s168, %s170
      %p177 = scmp.eq.s32.totalorder %s29, 1
      %p178 = por %p176, %p177
      %p179 = scmp.ne.s32.totalorder %s170, %s171
      %p180 = scmp.eq.s32.totalorder %s29, 0
      %p181 = por %p179, %p180
      %p182 = scmp.ne.s32.totalorder %s170, %s171
      %p183 = scmp.eq.s32.totalorder %s30, 1
      %p184 = por %p182, %p183
      %p186 = scmp.ne.s32.totalorder %s171, %s185
      %p187 = scmp.eq.s32.totalorder %s30, 0
      %p188 = por %p186, %p187
      %s190 = sadd.s32 %s189, 1
      %p193 = scmp.eq.s32.totalorder %s24, 1
      %p194 = scmp.ne.s32.totalorder %s189, %s191
      %p195 = scmp.eq.s32.totalorder %s24, 0
      %p196 = por %p194, %p195
      %p197 = scmp.ne.s32.totalorder %s189, %s191
      %p198 = scmp.eq.s32.totalorder %s29, 1
      %p199 = por %p197, %p198
      %p200 = scmp.ne.s32.totalorder %s191, %s192
      %p201 = scmp.eq.s32.totalorder %s29, 0
      %p202 = por %p200, %p201
      %p203 = scmp.ne.s32.totalorder %s191, %s192
      %p204 = scmp.eq.s32.totalorder %s30, 1
      %p205 = por %p203, %p204
      %p207 = scmp.ne.s32.totalorder %s192, %s206
      %p208 = scmp.eq.s32.totalorder %s30, 0
      %p209 = por %p207, %p208
      %s210 = ssub.s32 %s24, %s31
      %p211 = scmp.eq.s32.totalorder %s210, 0
      %s213 = sadd.s32 %s212, 1
      %s214 = scalar_select %p211, %s212, %s213
      %p217 = pneg %p211
      %p218 = scmp.eq.s32.totalorder %s24, 1
      %p219 = por %p217, %p218
      %p220 = scmp.ne.s32.totalorder %s212, %s215
      %p221 = scmp.eq.s32.totalorder %s24, 0
      %p222 = por %p220, %p221
      %p223 = scmp.ne.s32.totalorder %s212, %s215
      %p224 = scmp.eq.s32.totalorder %s29, 1
      %p225 = por %p223, %p224
      %p226 = scmp.ne.s32.totalorder %s215, %s216
      %p227 = scmp.eq.s32.totalorder %s29, 0
      %p228 = por %p226, %p227
      %p229 = scmp.ne.s32.totalorder %s215, %s216
      %p230 = scmp.eq.s32.totalorder %s30, 1
      %p231 = por %p229, %p230
      %p233 = scmp.ne.s32.totalorder %s216, %s232
      %p234 = scmp.eq.s32.totalorder %s30, 0
      %p235 = por %p233, %p234
      %p236 = scmp.le.s32.totalorder 1, %s24
      %p237 = scmp.lt.s32.totalorder %s24, 3
      %p238 = pnand %p236, %p237
      %p239 = pneg %p238
      // Predicated region
      $region9: #{tpu_custom_call.1} parent=5 // pred_check
        _
      $region10: #{tpu_custom_call.1} parent=5 // pred_check_branch
        %241 = sbr.rel (%p238) target = $region12
      $region11: #{tpu_custom_call.1} parent=5 // pred_region
        %s242 = ssub.s32 %s24, 1
        // Predicated region
        $region13: #{tpu_custom_call.1} parent=11 // pred_check
          %p243 = pneg %p45
        $region14: #{tpu_custom_call.1} parent=11 // pred_check_branch
          %245 = sbr.rel (%p243) target = $region16
        $region15: #{tpu_custom_call.1} parent=11 // pred_region
          %s247 = ssub.s32 16, 16
          %248 = vsyncadd [#allocation5], %s247
          %251 = dma.hbm_to_smem %s0, 16, [#allocation2], [#allocation5]
        $region16: #{tpu_custom_call.1} parent=11 // pred_fallthru
          _
        // Predicated region
        $region17: #{tpu_custom_call.1} parent=11 // pred_check
          %p252 = pneg %p118
        $region18: #{tpu_custom_call.1} parent=11 // pred_check_branch
          %254 = sbr.rel (%p252) target = $region20
        $region19: #{tpu_custom_call.1} parent=11 // pred_region
          _
        $region20: #{tpu_custom_call.1} parent=11 // pred_fallthru
          _
        // Predicated region
        $region21: #{tpu_custom_call.1} parent=11 // pred_check
          %p255 = pneg %p139
        $region22: #{tpu_custom_call.1} parent=11 // pred_check_branch
          %257 = sbr.rel (%p255) target = $region24
        $region23: #{tpu_custom_call.1} parent=11 // pred_region
          _
        $region24: #{tpu_custom_call.1} parent=11 // pred_fallthru
          _
        // Predicated region
        $region25: #{tpu_custom_call.1} parent=11 // pred_check
          %p258 = pneg %p160
        $region26: #{tpu_custom_call.1} parent=11 // pred_check_branch
          %260 = sbr.rel (%p258) target = $region28
        $region27: #{tpu_custom_call.1} parent=11 // pred_region
          _
        $region28: #{tpu_custom_call.1} parent=11 // pred_fallthru
          _
        // Predicated region
        $region29: #{tpu_custom_call.1} parent=11 // pred_check
          %p261 = pneg %p181
        $region30: #{tpu_custom_call.1} parent=11 // pred_check_branch
          %263 = sbr.rel (%p261) target = $region32
        $region31: #{tpu_custom_call.1} parent=11 // pred_region
          %s265 = ssub.s32 8192, 8192
          %266 = vsyncadd [#allocation8], %s265
          %s267 = sshll.u32 [#allocation9], 4
          %s268 = int_to_ptr.vmem [resolvable:$true] %s267
          %273 = dma.hbm_to_vmem [thread:$0]  %s6, 8192, %s268, [#allocation8], 128, 128, 8
        $region32: #{tpu_custom_call.1} parent=11 // pred_fallthru
          _
        // Predicated region
        $region33: #{tpu_custom_call.1} parent=11 // pred_check
          %p274 = pneg %p202
        $region34: #{tpu_custom_call.1} parent=11 // pred_check_branch
          %276 = sbr.rel (%p274) target = $region36
        $region35: #{tpu_custom_call.1} parent=11 // pred_region
          _
        $region36: #{tpu_custom_call.1} parent=11 // pred_fallthru
          _
      $region12: #{tpu_custom_call.1} parent=5 // pred_fallthru
        _
      %p277 = scmp.lt.s32.totalorder %s24, 2
      // Predicated region
      $region37: #{tpu_custom_call.1} parent=5 // pred_check
        %p278 = pneg %p277
      $region38: #{tpu_custom_call.1} parent=5 // pred_check_branch
        %280 = sbr.rel (%p278) target = $region40
      $region39: #{tpu_custom_call.1} parent=5 // pred_region
        // Predicated region
        $region41: #{tpu_custom_call.1} parent=39 // pred_check
          %p281 = pneg %p65
        $region42: #{tpu_custom_call.1} parent=39 // pred_check_branch
          %283 = sbr.rel (%p281) target = $region44
        $region43: #{tpu_custom_call.1} parent=39 // pred_region
          %s284 = sand.u32 %s55, 1
          %s285 = scalar_lea.sflag [#allocation3], %s284
          %s286 = sand.u32 %s55, 1
          %s287 = smul.addr %s286, 8
          %s288 = scalar_lea.vmem [#allocation6], %s287
          %s290 = ssub.s32 128, 128
          %291 = vsyncadd %s285, %s290
          %s292 = smul.addr %s24, 128
          %s293 = scalar_lea.hbm %s1, %s292
          %s295 = sshll.u32 %s288, 4
          %s296 = int_to_ptr.vmem [resolvable:$true] %s295
          %298 = dma.hbm_to_vmem [thread:$0]  %s293, 128, %s296, %s285
        $region44: #{tpu_custom_call.1} parent=39 // pred_fallthru
          _
        // Predicated region
        $region45: #{tpu_custom_call.1} parent=39 // pred_check
          %p299 = pneg %p91
        $region46: #{tpu_custom_call.1} parent=39 // pred_check_branch
          %301 = sbr.rel (%p299) target = $region48
        $region47: #{tpu_custom_call.1} parent=39 // pred_region
          %s302 = sand.u32 %s24, 1
          %s303 = scalar_lea.sflag [#allocation8], %s302
          %s304 = sand.u32 %s81, 1
          %s305 = smul.addr %s304, 16
          %s306 = scalar_lea.vmem [#allocation7], %s305
          %s308 = ssub.s32 256, 256
          %309 = vsyncadd %s303, %s308
          %s310 = smul.addr %s24, 2
          %s311 = smul.addr %s310, 128
          %s312 = scalar_lea.hbm %s2, %s311
          %s313 = sshll.u32 %s306, 4
          %s314 = int_to_ptr.vmem [resolvable:$true] %s313
          %319 = dma.hbm_to_vmem [thread:$0]  %s312, 256, %s314, %s303, 128, 128, 8
        $region48: #{tpu_custom_call.1} parent=39 // pred_fallthru
          _
      $region40: #{tpu_custom_call.1} parent=5 // pred_fallthru
        _
      %p320 = scmp.le.s32.totalorder 1, %s24
      %p321 = scmp.lt.s32.totalorder %s24, 3
      %p322 = pnand %p320, %p321
      %p323 = pneg %p322
      // Predicated region
      $region49: #{tpu_custom_call.1} parent=5 // pred_check
        _
      $region50: #{tpu_custom_call.1} parent=5 // pred_check_branch
        %325 = sbr.rel (%p322) target = $region52
      $region51: #{tpu_custom_call.1} parent=5 // pred_region
        %s326 = ssub.s32 %s24, 1
        // Predicated region
        $region53: #{tpu_custom_call.1} parent=51 // pred_check
          %p327 = pneg %p45
        $region54: #{tpu_custom_call.1} parent=51 // pred_check_branch
          %329 = sbr.rel (%p327) target = $region56
        $region55: #{tpu_custom_call.1} parent=51 // pred_region
          %330 = dma.done [#allocation5], 16
        $region56: #{tpu_custom_call.1} parent=51 // pred_fallthru
          _
        %s331 = sand.u32 %s58, 1
        %s332 = scalar_lea.sflag [#allocation3], %s331
        %s333 = sand.u32 %s58, 1
        %s334 = smul.addr %s333, 8
        %s335 = scalar_lea.vmem [#allocation6], %s334
        // Predicated region
        $region57: #{tpu_custom_call.1} parent=51 // pred_check
          %p336 = pneg %p71
        $region58: #{tpu_custom_call.1} parent=51 // pred_check_branch
          %338 = sbr.rel (%p336) target = $region60
        $region59: #{tpu_custom_call.1} parent=51 // pred_region
          %339 = dma.done %s332, 128
        $region60: #{tpu_custom_call.1} parent=51 // pred_fallthru
          _
        %s340 = sand.u32 %s29, 1
        %s341 = scalar_lea.sflag [#allocation8], %s340
        %s342 = sand.u32 %s84, 1
        %s343 = smul.addr %s342, 16
        %s344 = scalar_lea.vmem [#allocation7], %s343
        // Predicated region
        $region61: #{tpu_custom_call.1} parent=51 // pred_check
          %p345 = pneg %p97
        $region62: #{tpu_custom_call.1} parent=51 // pred_check_branch
          %347 = sbr.rel (%p345) target = $region64
        $region63: #{tpu_custom_call.1} parent=51 // pred_region
          %348 = dma.done %s341, 256
        $region64: #{tpu_custom_call.1} parent=51 // pred_fallthru
          _
        // Predicated region
        $region65: #{tpu_custom_call.1} parent=51 // pred_check
          %p349 = pneg %p181
        $region66: #{tpu_custom_call.1} parent=51 // pred_check_branch
          %351 = sbr.rel (%p349) target = $region68
        $region67: #{tpu_custom_call.1} parent=51 // pred_region
          %352 = dma.done [#allocation8], 8192
        $region68: #{tpu_custom_call.1} parent=51 // pred_fallthru
          _
        %353 = sfence
        %p354 = pneg %p45
        %p355 = pneg %p42
        %s356 = sand.u32 %s58, 1
        %s357 = scalar_lea.sflag [#allocation3], %s356
        %s358 = sand.u32 %s58, 1
        %s359 = smul.addr %s358, 8
        %s360 = scalar_lea.vmem [#allocation6], %s359
        %p361 = pneg %p71
        %p362 = pneg %p68
        %s363 = sand.u32 %s29, 1
        %s364 = scalar_lea.sflag [#allocation8], %s363
        %s365 = sand.u32 %s84, 1
        %s366 = smul.addr %s365, 16
        %s367 = scalar_lea.vmem [#allocation7], %s366
        %p368 = pneg %p97
        %p369 = pneg %p94
        %p370 = pneg %p118
        %p371 = pneg %p115
        %p372 = pneg %p139
        %p373 = pneg %p136
        %p374 = pneg %p160
        %p375 = pneg %p157
        %p376 = pneg %p181
        %p377 = pneg %p178
        %p378 = pneg %p202
        %p379 = pneg %p199
        %p380 = pneg %p228
        %p381 = pneg %p225
        %s382 = sand.u32 %s215, 1
        %s383 = scalar_lea.sflag [#allocation4], %s382
        %s384 = sand.u32 %s215, 1
        %s385 = smul.addr %s384, 16
        %s386 = scalar_lea.vmem [#allocation10], %s385
        %v387 = vld [vmem:[%s335] sm:$0xff]
        %v388 = vld [vmem:[%s344] sm:$0xff]
        %v389 = vld [vmem:[%s344 + $0x8] sm:$0xff]
        %v390 = vld [vmem:[%s3] sm:$0x1]
        %v391 = vld [vmem:[%s4] sm:$0x1]
        %v392 = vld [vmem:[%s5] sm:$0x1]
        %s393 = sld [smem:[#allocation2]]
        %s394 = sld [smem:[#allocation2 + $0x1]]
        %s395 = sld [smem:[#allocation2 + $0x2]]
        %v397 = vlaneseq
        %v398 = vshrl.u32 %v397, 7
        %v399 = vsub.s32 0, %v398
        %v400 = vrot.slane %v390, %v399
        %v402 = vmul.f32 %v388, %v400
        %v403 = vmul.f32 %v389, %v400
        %404 = vadd.xlane.f32.xlu0 %v402
        %v405 = vpop.xlane.xlu0 %404
        %406 = vadd.xlane.f32.xlu0 %v403
        %v407 = vpop.xlane.xlu0 %406
        %v408 = vstv %s393
        %v409 = vadd.f32 %v405, %v408
        %v410 = vadd.f32 %v407, %v408
        %v412 = vlaneseq
        %v413 = vshrl.u32 %v412, 7
        %v414 = vsub.s32 0, %v413
        %v415 = vrot.slane %v391, %v414
        %v417 = vmul.f32 %v387, %v415
        %418 = vadd.xlane.f32.xlu0 %v417
        %v419 = vpop.xlane.xlu0 %418
        %v420 = vstv %s394
        %v421 = vadd.f32 %v419, %v420
        %v423 = vlaneseq
        %v424 = vshrl.u32 %v423, 7
        %v425 = vsub.s32 0, %v424
        %v426 = vrot.slane %v392, %v425
        %v428 = vmul.f32 %v388, %v426
        %v429 = vmul.f32 %v389, %v426
        %v430 = vstv %s395
        %431 = vmatprep.subr.mxu0 0.0
        %432 = vmatpush1.xpose.msra.mxu0 0.0
        %433 = vmatprep.subr.mxu0 0.0
        %434 = vmatpush1.xpose.msra.mxu0 0.0
        %435 = vmatprep.subr.mxu0 0.0
        %436 = vmatpush1.xpose.msra.mxu0 0.0
        %437 = vmatprep.subr.mxu0 0.0
        %438 = vmatpush1.xpose.msra.mxu0 0.0
        %439 = vmatprep.subr.mxu0 0.0
        %440 = vmatpush1.xpose.msra.mxu0 0.0
        %441 = vmatprep.subr.mxu0 0.0
        %442 = vmatpush1.xpose.msra.mxu0 0.0
        %443 = vmatprep.subr.mxu0 0.0
        %444 = vmatpush1.xpose.msra.mxu0 0.0
        %445 = vmatprep.subr.mxu0 0.0
        %446 = vmatpush1.xpose.msra.mxu0 0.0
        %447 = vmatprep.subr.mxu0 0.0
        %448 = vmatpush1.xpose.msra.mxu0 0.0
        %449 = vmatprep.subr.mxu0 0.0
        %450 = vmatpush1.xpose.msra.mxu0 0.0
        %451 = vmatprep.subr.mxu0 0.0
        %452 = vmatpush1.xpose.msra.mxu0 0.0
        %453 = vmatprep.subr.mxu0 0.0
        %454 = vmatpush1.xpose.msra.mxu0 0.0
        %455 = vmatprep.subr.mxu0 0.0
        %456 = vmatpush1.xpose.msra.mxu0 0.0
        %457 = vmatprep.subr.mxu0 0.0
        %458 = vmatpush1.xpose.msra.mxu0 0.0
        %459 = vmatprep.subr.mxu0 0.0
        %460 = vmatpush1.xpose.msra.mxu0 0.0
        %461 = vmatprep.subr.mxu0 0.0
        %462 = vmatpush1.xpose.msra.mxu0 %v387
        %463 = vmatprep.subr.mxu0 0.0
        %464 = vmatpush2.xpose.msra.mxu0 0.0
        %465 = vmatprep.subr.mxu0 0.0
        %466 = vmatpush2.xpose.msra.mxu0 0.0
        %467 = vmatprep.subr.mxu0 0.0
        %468 = vmatpush2.xpose.msra.mxu0 0.0
        %469 = vmatprep.subr.mxu0 0.0
        %470 = vmatpush2.xpose.msra.mxu0 0.0
        %471 = vmatprep.subr.mxu0 0.0
        %472 = vmatpush2.xpose.msra.mxu0 0.0
        %473 = vmatprep.subr.mxu0 0.0
        %474 = vmatpush2.xpose.msra.mxu0 0.0
        %475 = vmatprep.subr.mxu0 0.0
        %476 = vmatpush2.xpose.msra.mxu0 0.0
        %477 = vmatprep.subr.mxu0 0.0
        %478 = vmatpush2.xpose.msra.mxu0 0.0
        %479 = vmatprep.subr.mxu0 0.0
        %480 = vmatpush2.xpose.msra.mxu0 0.0
        %481 = vmatprep.subr.mxu0 0.0
        %482 = vmatpush2.xpose.msra.mxu0 0.0
        %483 = vmatprep.subr.mxu0 0.0
        %484 = vmatpush2.xpose.msra.mxu0 0.0
        %485 = vmatprep.subr.mxu0 0.0
        %486 = vmatpush2.xpose.msra.mxu0 0.0
        %487 = vmatprep.subr.mxu0 0.0
        %488 = vmatpush2.xpose.msra.mxu0 0.0
        %489 = vmatprep.subr.mxu0 0.0
        %490 = vmatpush2.xpose.msra.mxu0 0.0
        %491 = vmatprep.subr.mxu0 0.0
        %492 = vmatpush2.xpose.msra.mxu0 0.0
        %493 = vmatprep.subr.mxu0 0.0
        %494 = vmatpush2.xpose.msra.mxu0 0.0
        %495 = vmatprep.mubr.f32.mxu0 0.0
        %496 = vmatmul.mubr.f32.gmra.mxu0 %v428
        %v497 = vpop.f32.mrf.mxu0
        %v498 = vadd.f32 %v430, %v497
        %v499 = vpop.f32.mrf.mxu0
        %500 = vmatprep.mubr.f32.mxu0 0.0
        %501 = vmatmul.mubr.f32.gmra.mxu0 %v429
        %v502 = vpop.f32.mrf.mxu0
        %v503 = vadd.f32 %v430, %v502
        %v504 = vpop.f32.mrf.mxu0
        %505 = vdwg.mxu0
        %v506 = vadd.f32 %v498, %v409
        %v507 = vadd.f32 %v503, %v410
        %508 = vxpose.xlu0.b32.start [1/16] %v421, 128
        %509 = vxpose.xlu0.b32.cont [2/16] 0.0, 128
        %510 = vxpose.xlu0.b32.cont [3/16] 0.0, 128
        %511 = vxpose.xlu0.b32.cont [4/16] 0.0, 128
        %512 = vxpose.xlu0.b32.cont [5/16] 0.0, 128
        %513 = vxpose.xlu0.b32.cont [6/16] 0.0, 128
        %514 = vxpose.xlu0.b32.cont [7/16] 0.0, 128
        %515 = vxpose.xlu0.b32.cont [8/16] 0.0, 128
        %516 = vxpose.xlu0.b32.cont [9/16] 0.0, 128
        %517 = vxpose.xlu0.b32.cont [10/16] 0.0, 128
        %518 = vxpose.xlu0.b32.cont [11/16] 0.0, 128
        %519 = vxpose.xlu0.b32.cont [12/16] 0.0, 128
        %520 = vxpose.xlu0.b32.cont [13/16] 0.0, 128
        %521 = vxpose.xlu0.b32.cont [14/16] 0.0, 128
        %522 = vxpose.xlu0.b32.cont [15/16] 0.0, 128
        %523 = vxpose.xlu0.b32.end [16/16] 0.0, 128
        %v524 = vpop.trf.xlu0
        %v525 = vpop.trf.xlu0
        %v526 = vpop.trf.xlu0
        %v527 = vpop.trf.xlu0
        %v528 = vpop.trf.xlu0
        %v529 = vpop.trf.xlu0
        %v530 = vpop.trf.xlu0
        %v531 = vpop.trf.xlu0
        %v532 = vpop.trf.xlu0
        %v533 = vpop.trf.xlu0
        %v534 = vpop.trf.xlu0
        %v535 = vpop.trf.xlu0
        %v536 = vpop.trf.xlu0
        %v537 = vpop.trf.xlu0
        %v538 = vpop.trf.xlu0
        %v539 = vpop.trf.xlu0
        %v540 = vlaneseq
        %v541 = vshrl.u32 %v540, 7
        %v542 = vsub.s32 0, %v541
        %v543 = vrot.slane %v524, %v542
        %v544 = vadd.f32 %v506, %v543
        %v545 = vadd.f32 %v507, %v543
        %vm546 = vcmask 64512
        %v547 = vsel %vm546, %v544, -inf
        %548 = vmax.xlane.f32.xlu0 %v547
        %v549 = vpop.xlane.xlu0 %548
        %v550 = vsel %vm546, %v545, -inf
        %551 = vmax.xlane.f32.xlu0 %v550
        %v552 = vpop.xlane.xlu0 %551
        %v553 = vsub.f32 %v544, %v549
        %v554 = vsub.f32 %v545, %v552
        %v555 = vmul.f32 %v553, 1.442695
        %v556 = vpow.pop %v555
        %v557 = vmul.f32 %v554, 1.442695
        %v558 = vpow.pop %v557
        %v559 = vsel %vm546, %v556, 0.0
        %560 = vadd.xlane.f32.xlu0 %v559
        %v561 = vpop.xlane.xlu0 %560
        %v562 = vsel %vm546, %v558, 0.0
        %563 = vadd.xlane.f32.xlu0 %v562
        %v564 = vpop.xlane.xlu0 %563
        %v565 = vrcp.pop %v561
        %v566 = vmul.f32 1.0, %v565
        %v567 = vrcp.pop %v564
        %v568 = vmul.f32 1.0, %v567
        %v570 = vsel %vm546, %v556, 0
        %v573 = vsel %vm546, %v558, 0
        %575 = vmatprep.subr.mxu0 0.0
        %576 = vmatpush1.msra.mxu0 0.0
        %577 = vmatprep.subr.mxu0 0.0
        %578 = vmatpush1.msra.mxu0 0.0
        %579 = vmatprep.subr.mxu0 0.0
        %580 = vmatpush1.msra.mxu0 0.0
        %581 = vmatprep.subr.mxu0 0.0
        %582 = vmatpush1.msra.mxu0 0.0
        %583 = vmatprep.subr.mxu0 0.0
        %584 = vmatpush1.msra.mxu0 0.0
        %585 = vmatprep.subr.mxu0 0.0
        %586 = vmatpush1.msra.mxu0 0.0
        %587 = vmatprep.subr.mxu0 0.0
        %588 = vmatpush1.msra.mxu0 0.0
        %589 = vmatprep.subr.mxu0 0.0
        %590 = vmatpush1.msra.mxu0 0.0
        %591 = vmatprep.subr.mxu0 0.0
        %592 = vmatpush1.msra.mxu0 0.0
        %593 = vmatprep.subr.mxu0 0.0
        %594 = vmatpush1.msra.mxu0 0.0
        %595 = vmatprep.subr.mxu0 0.0
        %596 = vmatpush1.msra.mxu0 0.0
        %597 = vmatprep.subr.mxu0 0.0
        %598 = vmatpush1.msra.mxu0 0.0
        %599 = vmatprep.subr.mxu0 0.0
        %600 = vmatpush1.msra.mxu0 0.0
        %601 = vmatprep.subr.mxu0 0.0
        %602 = vmatpush1.msra.mxu0 0.0
        %603 = vmatprep.subr.mxu0 0.0
        %604 = vmatpush1.msra.mxu0 0.0
        %605 = vmatprep.subr.mxu0 0.0
        %606 = vmatpush1.msra.mxu0 %v387
        %607 = vmatprep.subr.mxu0 0.0
        %608 = vmatpush2.msra.mxu0 0.0
        %609 = vmatprep.subr.mxu0 0.0
        %610 = vmatpush2.msra.mxu0 0.0
        %611 = vmatprep.subr.mxu0 0.0
        %612 = vmatpush2.msra.mxu0 0.0
        %613 = vmatprep.subr.mxu0 0.0
        %614 = vmatpush2.msra.mxu0 0.0
        %615 = vmatprep.subr.mxu0 0.0
        %616 = vmatpush2.msra.mxu0 0.0
        %617 = vmatprep.subr.mxu0 0.0
        %618 = vmatpush2.msra.mxu0 0.0
        %619 = vmatprep.subr.mxu0 0.0
        %620 = vmatpush2.msra.mxu0 0.0
        %621 = vmatprep.subr.mxu0 0.0
        %622 = vmatpush2.msra.mxu0 0.0
        %623 = vmatprep.subr.mxu0 0.0
        %624 = vmatpush2.msra.mxu0 0.0
        %625 = vmatprep.subr.mxu0 0.0
        %626 = vmatpush2.msra.mxu0 0.0
        %627 = vmatprep.subr.mxu0 0.0
        %628 = vmatpush2.msra.mxu0 0.0
        %629 = vmatprep.subr.mxu0 0.0
        %630 = vmatpush2.msra.mxu0 0.0
        %631 = vmatprep.subr.mxu0 0.0
        %632 = vmatpush2.msra.mxu0 0.0
        %633 = vmatprep.subr.mxu0 0.0
        %634 = vmatpush2.msra.mxu0 0.0
        %635 = vmatprep.subr.mxu0 0.0
        %636 = vmatpush2.msra.mxu0 0.0
        %637 = vmatprep.subr.mxu0 0.0
        %638 = vmatpush2.msra.mxu0 0.0
        %639 = vmatprep.mubr.f32.mxu0 0.0
        %640 = vmatmul.mubr.f32.gmra.mxu0 %v570
        %v641 = vpop.f32.mrf.mxu0
        %v642 = vadd.f32 0.0, %v641
        %v643 = vpop.f32.mrf.mxu0
        %644 = vmatprep.mubr.f32.mxu0 0.0
        %645 = vmatmul.mubr.f32.gmra.mxu0 %v573
        %v646 = vpop.f32.mrf.mxu0
        %v647 = vadd.f32 0.0, %v646
        %v648 = vpop.f32.mrf.mxu0
        %649 = vdwg.mxu0
        %v650 = vmul.f32 %v642, %v566
        %v651 = vmul.f32 %v647, %v568
        %v652 = vmax.f32 %v549, %v552
        %v653 = vrot.slane %v652, 4
        %v654 = vmax.f32 %v652, %v653
        %v655 = vrot.slane %v654, 2
        %v656 = vmax.f32 %v654, %v655
        %v657 = vrot.slane %v656, 1
        %v658 = vmax.f32 %v656, %v657
        %s659 = vtos %v658
        %v660 = vstv %s659
        %v661 = vsub.f32 %v549, %v660
        %v662 = vsub.f32 %v552, %v660
        %v663 = vmul.f32 %v661, 1.442695
        %v664 = vpow.pop %v663
        %v665 = vmul.f32 %v662, 1.442695
        %v666 = vpow.pop %v665
        %vm667 = vcmask 7168
        %v668 = vsel %vm667, %v664, 0.0
        %v669 = vsel %vm667, %v666, 0.0
        %v670 = vadd.f32 %v668, %v669
        %671 = vadd.xlane.f32.xlu0 %v670
        %v672 = vpop.xlane.xlu0 %671
        %v673 = vrot.slane %v672, 4
        %v674 = vadd.f32 %v672, %v673
        %v675 = vrot.slane %v674, 2
        %v676 = vadd.f32 %v674, %v675
        %v677 = vrot.slane %v676, 1
        %v678 = vadd.f32 %v676, %v677
        %s679 = vtos %v678
        %v680 = vstv %s679
        %v681 = vrcp.pop %v680
        %v682 = vmul.f32 %v664, %v681
        %v683 = vmul.f32 %v666, %v681
        %v684 = vmul.f32 %v682, %v388
        %v685 = vmul.f32 %v683, %v389
        %v686 = vadd.f32 %v684, %v685
        %v687 = vrot.slane %v686, 4
        %v688 = vadd.f32 %v686, %v687
        %v689 = vrot.slane %v688, 2
        %v690 = vadd.f32 %v688, %v689
        %v691 = vrot.slane %v690, 1
        %v692 = vadd.f32 %v690, %v691
        %v693 = vld [vmem:[#allocation9] sm:$0xff]
        %v694 = vld [vmem:[#allocation9 + $0x8] sm:$0xff]
        %v695 = vld [vmem:[#allocation9 + $0x10] sm:$0xff]
        %v696 = vld [vmem:[#allocation9 + $0x18] sm:$0xff]
        %v697 = vld [vmem:[#allocation9 + $0x20] sm:$0xff]
        %v698 = vld [vmem:[#allocation9 + $0x28] sm:$0xff]
        %v699 = vld [vmem:[#allocation9 + $0x30] sm:$0xff]
        %v700 = vld [vmem:[#allocation9 + $0x38] sm:$0xff]
        %v701 = vld [vmem:[#allocation9 + $0x40] sm:$0xff]
        %v702 = vld [vmem:[#allocation9 + $0x48] sm:$0xff]
        %v703 = vld [vmem:[#allocation9 + $0x50] sm:$0xff]
        %v704 = vld [vmem:[#allocation9 + $0x58] sm:$0xff]
        %v705 = vld [vmem:[#allocation9 + $0x60] sm:$0xff]
        %v706 = vld [vmem:[#allocation9 + $0x68] sm:$0xff]
        %v707 = vld [vmem:[#allocation9 + $0x70] sm:$0xff]
        %v708 = vld [vmem:[#allocation9 + $0x78] sm:$0xff]
        %v709 = vld [vmem:[#allocation9 + $0x80] sm:$0xff]
        %v710 = vld [vmem:[#allocation9 + $0x88] sm:$0xff]
        %v711 = vld [vmem:[#allocation9 + $0x90] sm:$0xff]
        %v712 = vld [vmem:[#allocation9 + $0x98] sm:$0xff]
        %v713 = vld [vmem:[#allocation9 + $0xa0] sm:$0xff]
        %v714 = vld [vmem:[#allocation9 + $0xa8] sm:$0xff]
        %v715 = vld [vmem:[#allocation9 + $0xb0] sm:$0xff]
        %v716 = vld [vmem:[#allocation9 + $0xb8] sm:$0xff]
        %v717 = vld [vmem:[#allocation9 + $0xc0] sm:$0xff]
        %v718 = vld [vmem:[#allocation9 + $0xc8] sm:$0xff]
        %v719 = vld [vmem:[#allocation9 + $0xd0] sm:$0xff]
        %v720 = vld [vmem:[#allocation9 + $0xd8] sm:$0xff]
        %v721 = vld [vmem:[#allocation9 + $0xe0] sm:$0xff]
        %v722 = vld [vmem:[#allocation9 + $0xe8] sm:$0xff]
        %v723 = vld [vmem:[#allocation9 + $0xf0] sm:$0xff]
        %v724 = vld [vmem:[#allocation9 + $0xf8] sm:$0xff]
        %725 = vmatprep.subr.mxu0 0.0
        %726 = vmatpush1.msra.mxu0 %v724
        %727 = vmatprep.subr.mxu0 0.0
        %728 = vmatpush1.msra.mxu0 %v723
        %729 = vmatprep.subr.mxu0 0.0
        %730 = vmatpush1.msra.mxu0 %v722
        %731 = vmatprep.subr.mxu0 0.0
        %732 = vmatpush1.msra.mxu0 %v721
        %733 = vmatprep.subr.mxu0 0.0
        %734 = vmatpush1.msra.mxu0 %v720
        %735 = vmatprep.subr.mxu0 0.0
        %736 = vmatpush1.msra.mxu0 %v719
        %737 = vmatprep.subr.mxu0 0.0
        %738 = vmatpush1.msra.mxu0 %v718
        %739 = vmatprep.subr.mxu0 0.0
        %740 = vmatpush1.msra.mxu0 %v717
        %741 = vmatprep.subr.mxu0 0.0
        %742 = vmatpush1.msra.mxu0 %v716
        %743 = vmatprep.subr.mxu0 0.0
        %744 = vmatpush1.msra.mxu0 %v715
        %745 = vmatprep.subr.mxu0 0.0
        %746 = vmatpush1.msra.mxu0 %v714
        %747 = vmatprep.subr.mxu0 0.0
        %748 = vmatpush1.msra.mxu0 %v713
        %749 = vmatprep.subr.mxu0 0.0
        %750 = vmatpush1.msra.mxu0 %v712
        %751 = vmatprep.subr.mxu0 0.0
        %752 = vmatpush1.msra.mxu0 %v711
        %753 = vmatprep.subr.mxu0 0.0
        %754 = vmatpush1.msra.mxu0 %v710
        %755 = vmatprep.subr.mxu0 0.0
        %756 = vmatpush1.msra.mxu0 %v709
        %757 = vmatprep.subr.mxu0 0.0
        %758 = vmatpush2.msra.mxu0 0.0
        %759 = vmatprep.subr.mxu0 0.0
        %760 = vmatpush2.msra.mxu0 0.0
        %761 = vmatprep.subr.mxu0 0.0
        %762 = vmatpush2.msra.mxu0 0.0
        %763 = vmatprep.subr.mxu0 0.0
        %764 = vmatpush2.msra.mxu0 0.0
        %765 = vmatprep.subr.mxu0 0.0
        %766 = vmatpush2.msra.mxu0 0.0
        %767 = vmatprep.subr.mxu0 0.0
        %768 = vmatpush2.msra.mxu0 0.0
        %769 = vmatprep.subr.mxu0 0.0
        %770 = vmatpush2.msra.mxu0 0.0
        %771 = vmatprep.subr.mxu0 0.0
        %772 = vmatpush2.msra.mxu0 0.0
        %773 = vmatprep.subr.mxu0 0.0
        %774 = vmatpush2.msra.mxu0 0.0
        %775 = vmatprep.subr.mxu0 0.0
        %776 = vmatpush2.msra.mxu0 0.0
        %777 = vmatprep.subr.mxu0 0.0
        %778 = vmatpush2.msra.mxu0 0.0
        %779 = vmatprep.subr.mxu0 0.0
        %780 = vmatpush2.msra.mxu0 0.0
        %781 = vmatprep.subr.mxu0 0.0
        %782 = vmatpush2.msra.mxu0 0.0
        %783 = vmatprep.subr.mxu0 0.0
        %784 = vmatpush2.msra.mxu0 0.0
        %785 = vmatprep.subr.mxu0 0.0
        %786 = vmatpush2.msra.mxu0 0.0
        %787 = vmatprep.subr.mxu0 0.0
        %788 = vmatpush2.msra.mxu0 0.0
        %789 = vmatprep.mubr.f32.mxu0 0.0
        %790 = vmatmul.mubr.f32.gmra.mxu0 %v650
        %v791 = vpop.f32.mrf.mxu0
        %v792 = vadd.f32 0.0, %v791
        %v793 = vpop.f32.mrf.mxu0
        %794 = vmatprep.mubr.f32.mxu0 0.0
        %795 = vmatmul.mubr.f32.gmra.mxu0 %v651
        %v796 = vpop.f32.mrf.mxu0
        %v797 = vadd.f32 0.0, %v796
        %v798 = vpop.f32.mrf.mxu0
        %799 = vdwg.mxu0
        %800 = vmatprep.subr.mxu0 0.0
        %801 = vmatpush1.msra.mxu0 %v708
        %802 = vmatprep.subr.mxu0 0.0
        %803 = vmatpush1.msra.mxu0 %v707
        %804 = vmatprep.subr.mxu0 0.0
        %805 = vmatpush1.msra.mxu0 %v706
        %806 = vmatprep.subr.mxu0 0.0
        %807 = vmatpush1.msra.mxu0 %v705
        %808 = vmatprep.subr.mxu0 0.0
        %809 = vmatpush1.msra.mxu0 %v704
        %810 = vmatprep.subr.mxu0 0.0
        %811 = vmatpush1.msra.mxu0 %v703
        %812 = vmatprep.subr.mxu0 0.0
        %813 = vmatpush1.msra.mxu0 %v702
        %814 = vmatprep.subr.mxu0 0.0
        %815 = vmatpush1.msra.mxu0 %v701
        %816 = vmatprep.subr.mxu0 0.0
        %817 = vmatpush1.msra.mxu0 %v700
        %818 = vmatprep.subr.mxu0 0.0
        %819 = vmatpush1.msra.mxu0 %v699
        %820 = vmatprep.subr.mxu0 0.0
        %821 = vmatpush1.msra.mxu0 %v698
        %822 = vmatprep.subr.mxu0 0.0
        %823 = vmatpush1.msra.mxu0 %v697
        %824 = vmatprep.subr.mxu0 0.0
        %825 = vmatpush1.msra.mxu0 %v696
        %826 = vmatprep.subr.mxu0 0.0
        %827 = vmatpush1.msra.mxu0 %v695
        %828 = vmatprep.subr.mxu0 0.0
        %829 = vmatpush1.msra.mxu0 %v694
        %830 = vmatprep.subr.mxu0 0.0
        %831 = vmatpush1.msra.mxu0 %v693
        %832 = vmatprep.subr.mxu0 0.0
        %833 = vmatpush2.msra.mxu0 0.0
        %834 = vmatprep.subr.mxu0 0.0
        %835 = vmatpush2.msra.mxu0 0.0
        %836 = vmatprep.subr.mxu0 0.0
        %837 = vmatpush2.msra.mxu0 0.0
        %838 = vmatprep.subr.mxu0 0.0
        %839 = vmatpush2.msra.mxu0 0.0
        %840 = vmatprep.subr.mxu0 0.0
        %841 = vmatpush2.msra.mxu0 0.0
        %842 = vmatprep.subr.mxu0 0.0
        %843 = vmatpush2.msra.mxu0 0.0
        %844 = vmatprep.subr.mxu0 0.0
        %845 = vmatpush2.msra.mxu0 0.0
        %846 = vmatprep.subr.mxu0 0.0
        %847 = vmatpush2.msra.mxu0 0.0
        %848 = vmatprep.subr.mxu0 0.0
        %849 = vmatpush2.msra.mxu0 0.0
        %850 = vmatprep.subr.mxu0 0.0
        %851 = vmatpush2.msra.mxu0 0.0
        %852 = vmatprep.subr.mxu0 0.0
        %853 = vmatpush2.msra.mxu0 0.0
        %854 = vmatprep.subr.mxu0 0.0
        %855 = vmatpush2.msra.mxu0 0.0
        %856 = vmatprep.subr.mxu0 0.0
        %857 = vmatpush2.msra.mxu0 0.0
        %858 = vmatprep.subr.mxu0 0.0
        %859 = vmatpush2.msra.mxu0 0.0
        %860 = vmatprep.subr.mxu0 0.0
        %861 = vmatpush2.msra.mxu0 0.0
        %862 = vmatprep.subr.mxu0 0.0
        %863 = vmatpush2.msra.mxu0 0.0
        %864 = vmatprep.mubr.f32.mxu0 0.0
        %865 = vmatmul.mubr.f32.gmra.mxu0 %v388
        %v866 = vpop.f32.mrf.mxu0
        %v867 = vadd.f32 %v792, %v866
        %v868 = vpop.f32.mrf.mxu0
        %869 = vmatprep.mubr.f32.mxu0 0.0
        %870 = vmatmul.mubr.f32.gmra.mxu0 %v389
        %v871 = vpop.f32.mrf.mxu0
        %v872 = vadd.f32 %v797, %v871
        %v873 = vpop.f32.mrf.mxu0
        %874 = vdwg.mxu0
        %v875 = vmul.f32 %v388, %v650
        %v876 = vmul.f32 %v389, %v651
        %v877 = vld [vmem:[#allocation9 + $0x100] sm:$0xff]
        %v878 = vld [vmem:[#allocation9 + $0x108] sm:$0xff]
        %v879 = vld [vmem:[#allocation9 + $0x110] sm:$0xff]
        %v880 = vld [vmem:[#allocation9 + $0x118] sm:$0xff]
        %v881 = vld [vmem:[#allocation9 + $0x120] sm:$0xff]
        %v882 = vld [vmem:[#allocation9 + $0x128] sm:$0xff]
        %v883 = vld [vmem:[#allocation9 + $0x130] sm:$0xff]
        %v884 = vld [vmem:[#allocation9 + $0x138] sm:$0xff]
        %v885 = vld [vmem:[#allocation9 + $0x140] sm:$0xff]
        %v886 = vld [vmem:[#allocation9 + $0x148] sm:$0xff]
        %v887 = vld [vmem:[#allocation9 + $0x150] sm:$0xff]
        %v888 = vld [vmem:[#allocation9 + $0x158] sm:$0xff]
        %v889 = vld [vmem:[#allocation9 + $0x160] sm:$0xff]
        %v890 = vld [vmem:[#allocation9 + $0x168] sm:$0xff]
        %v891 = vld [vmem:[#allocation9 + $0x170] sm:$0xff]
        %v892 = vld [vmem:[#allocation9 + $0x178] sm:$0xff]
        %893 = vmatprep.subr.mxu0 0.0
        %894 = vmatpush1.msra.mxu0 %v892
        %895 = vmatprep.subr.mxu0 0.0
        %896 = vmatpush1.msra.mxu0 %v891
        %897 = vmatprep.subr.mxu0 0.0
        %898 = vmatpush1.msra.mxu0 %v890
        %899 = vmatprep.subr.mxu0 0.0
        %900 = vmatpush1.msra.mxu0 %v889
        %901 = vmatprep.subr.mxu0 0.0
        %902 = vmatpush1.msra.mxu0 %v888
        %903 = vmatprep.subr.mxu0 0.0
        %904 = vmatpush1.msra.mxu0 %v887
        %905 = vmatprep.subr.mxu0 0.0
        %906 = vmatpush1.msra.mxu0 %v886
        %907 = vmatprep.subr.mxu0 0.0
        %908 = vmatpush1.msra.mxu0 %v885
        %909 = vmatprep.subr.mxu0 0.0
        %910 = vmatpush1.msra.mxu0 %v884
        %911 = vmatprep.subr.mxu0 0.0
        %912 = vmatpush1.msra.mxu0 %v883
        %913 = vmatprep.subr.mxu0 0.0
        %914 = vmatpush1.msra.mxu0 %v882
        %915 = vmatprep.subr.mxu0 0.0
        %916 = vmatpush1.msra.mxu0 %v881
        %917 = vmatprep.subr.mxu0 0.0
        %918 = vmatpush1.msra.mxu0 %v880
        %919 = vmatprep.subr.mxu0 0.0
        %920 = vmatpush1.msra.mxu0 %v879
        %921 = vmatprep.subr.mxu0 0.0
        %922 = vmatpush1.msra.mxu0 %v878
        %923 = vmatprep.subr.mxu0 0.0
        %924 = vmatpush1.msra.mxu0 %v877
        %925 = vmatprep.subr.mxu0 0.0
        %926 = vmatpush2.msra.mxu0 0.0
        %927 = vmatprep.subr.mxu0 0.0
        %928 = vmatpush2.msra.mxu0 0.0
        %929 = vmatprep.subr.mxu0 0.0
        %930 = vmatpush2.msra.mxu0 0.0
        %931 = vmatprep.subr.mxu0 0.0
        %932 = vmatpush2.msra.mxu0 0.0
        %933 = vmatprep.subr.mxu0 0.0
        %934 = vmatpush2.msra.mxu0 0.0
        %935 = vmatprep.subr.mxu0 0.0
        %936 = vmatpush2.msra.mxu0 0.0
        %937 = vmatprep.subr.mxu0 0.0
        %938 = vmatpush2.msra.mxu0 0.0
        %939 = vmatprep.subr.mxu0 0.0
        %940 = vmatpush2.msra.mxu0 0.0
        %941 = vmatprep.subr.mxu0 0.0
        %942 = vmatpush2.msra.mxu0 0.0
        %943 = vmatprep.subr.mxu0 0.0
        %944 = vmatpush2.msra.mxu0 0.0
        %945 = vmatprep.subr.mxu0 0.0
        %946 = vmatpush2.msra.mxu0 0.0
        %947 = vmatprep.subr.mxu0 0.0
        %948 = vmatpush2.msra.mxu0 0.0
        %949 = vmatprep.subr.mxu0 0.0
        %950 = vmatpush2.msra.mxu0 0.0
        %951 = vmatprep.subr.mxu0 0.0
        %952 = vmatpush2.msra.mxu0 0.0
        %953 = vmatprep.subr.mxu0 0.0
        %954 = vmatpush2.msra.mxu0 0.0
        %955 = vmatprep.subr.mxu0 0.0
        %956 = vmatpush2.msra.mxu0 0.0
        %957 = vmatprep.mubr.f32.mxu0 0.0
        %958 = vmatmul.mubr.f32.gmra.mxu0 %v875
        %v959 = vpop.f32.mrf.mxu0
        %v960 = vadd.f32 0.0, %v959
        %v961 = vpop.f32.mrf.mxu0
        %962 = vmatprep.mubr.f32.mxu0 0.0
        %963 = vmatmul.mubr.f32.gmra.mxu0 %v876
        %v964 = vpop.f32.mrf.mxu0
        %v965 = vadd.f32 0.0, %v964
        %v966 = vpop.f32.mrf.mxu0
        %967 = vdwg.mxu0
        %v968 = vadd.f32 %v867, %v960
        %v969 = vadd.f32 %v872, %v965
        %v970 = vmul.f32 %v388, %v692
        %v971 = vmul.f32 %v389, %v692
        %v972 = vld [vmem:[#allocation9 + $0x180] sm:$0xff]
        %v973 = vld [vmem:[#allocation9 + $0x188] sm:$0xff]
        %v974 = vld [vmem:[#allocation9 + $0x190] sm:$0xff]
        %v975 = vld [vmem:[#allocation9 + $0x198] sm:$0xff]
        %v976 = vld [vmem:[#allocation9 + $0x1a0] sm:$0xff]
        %v977 = vld [vmem:[#allocation9 + $0x1a8] sm:$0xff]
        %v978 = vld [vmem:[#allocation9 + $0x1b0] sm:$0xff]
        %v979 = vld [vmem:[#allocation9 + $0x1b8] sm:$0xff]
        %v980 = vld [vmem:[#allocation9 + $0x1c0] sm:$0xff]
        %v981 = vld [vmem:[#allocation9 + $0x1c8] sm:$0xff]
        %v982 = vld [vmem:[#allocation9 + $0x1d0] sm:$0xff]
        %v983 = vld [vmem:[#allocation9 + $0x1d8] sm:$0xff]
        %v984 = vld [vmem:[#allocation9 + $0x1e0] sm:$0xff]
        %v985 = vld [vmem:[#allocation9 + $0x1e8] sm:$0xff]
        %v986 = vld [vmem:[#allocation9 + $0x1f0] sm:$0xff]
        %v987 = vld [vmem:[#allocation9 + $0x1f8] sm:$0xff]
        %988 = vmatprep.subr.mxu0 0.0
        %989 = vmatpush1.msra.mxu0 %v987
        %990 = vmatprep.subr.mxu0 0.0
        %991 = vmatpush1.msra.mxu0 %v986
        %992 = vmatprep.subr.mxu0 0.0
        %993 = vmatpush1.msra.mxu0 %v985
        %994 = vmatprep.subr.mxu0 0.0
        %995 = vmatpush1.msra.mxu0 %v984
        %996 = vmatprep.subr.mxu0 0.0
        %997 = vmatpush1.msra.mxu0 %v983
        %998 = vmatprep.subr.mxu0 0.0
        %999 = vmatpush1.msra.mxu0 %v982
        %1000 = vmatprep.subr.mxu0 0.0
        %1001 = vmatpush1.msra.mxu0 %v981
        %1002 = vmatprep.subr.mxu0 0.0
        %1003 = vmatpush1.msra.mxu0 %v980
        %1004 = vmatprep.subr.mxu0 0.0
        %1005 = vmatpush1.msra.mxu0 %v979
        %1006 = vmatprep.subr.mxu0 0.0
        %1007 = vmatpush1.msra.mxu0 %v978
        %1008 = vmatprep.subr.mxu0 0.0
        %1009 = vmatpush1.msra.mxu0 %v977
        %1010 = vmatprep.subr.mxu0 0.0
        %1011 = vmatpush1.msra.mxu0 %v976
        %1012 = vmatprep.subr.mxu0 0.0
        %1013 = vmatpush1.msra.mxu0 %v975
        %1014 = vmatprep.subr.mxu0 0.0
        %1015 = vmatpush1.msra.mxu0 %v974
        %1016 = vmatprep.subr.mxu0 0.0
        %1017 = vmatpush1.msra.mxu0 %v973
        %1018 = vmatprep.subr.mxu0 0.0
        %1019 = vmatpush1.msra.mxu0 %v972
        %1020 = vmatprep.subr.mxu0 0.0
        %1021 = vmatpush2.msra.mxu0 0.0
        %1022 = vmatprep.subr.mxu0 0.0
        %1023 = vmatpush2.msra.mxu0 0.0
        %1024 = vmatprep.subr.mxu0 0.0
        %1025 = vmatpush2.msra.mxu0 0.0
        %1026 = vmatprep.subr.mxu0 0.0
        %1027 = vmatpush2.msra.mxu0 0.0
        %1028 = vmatprep.subr.mxu0 0.0
        %1029 = vmatpush2.msra.mxu0 0.0
        %1030 = vmatprep.subr.mxu0 0.0
        %1031 = vmatpush2.msra.mxu0 0.0
        %1032 = vmatprep.subr.mxu0 0.0
        %1033 = vmatpush2.msra.mxu0 0.0
        %1034 = vmatprep.subr.mxu0 0.0
        %1035 = vmatpush2.msra.mxu0 0.0
        %1036 = vmatprep.subr.mxu0 0.0
        %1037 = vmatpush2.msra.mxu0 0.0
        %1038 = vmatprep.subr.mxu0 0.0
        %1039 = vmatpush2.msra.mxu0 0.0
        %1040 = vmatprep.subr.mxu0 0.0
        %1041 = vmatpush2.msra.mxu0 0.0
        %1042 = vmatprep.subr.mxu0 0.0
        %1043 = vmatpush2.msra.mxu0 0.0
        %1044 = vmatprep.subr.mxu0 0.0
        %1045 = vmatpush2.msra.mxu0 0.0
        %1046 = vmatprep.subr.mxu0 0.0
        %1047 = vmatpush2.msra.mxu0 0.0
        %1048 = vmatprep.subr.mxu0 0.0
        %1049 = vmatpush2.msra.mxu0 0.0
        %1050 = vmatprep.subr.mxu0 0.0
        %1051 = vmatpush2.msra.mxu0 0.0
        %1052 = vmatprep.mubr.f32.mxu0 0.0
        %1053 = vmatmul.mubr.f32.gmra.mxu0 %v970
        %v1054 = vpop.f32.mrf.mxu0
        %v1055 = vadd.f32 0.0, %v1054
        %v1056 = vpop.f32.mrf.mxu0
        %1057 = vmatprep.mubr.f32.mxu0 0.0
        %1058 = vmatmul.mubr.f32.gmra.mxu0 %v971
        %v1059 = vpop.f32.mrf.mxu0
        %v1060 = vadd.f32 0.0, %v1059
        %v1061 = vpop.f32.mrf.mxu0
        %1062 = vdwg.mxu0
        %v1063 = vadd.f32 %v968, %v1055
        %v1064 = vadd.f32 %v969, %v1060
        %v1065 = vld [vmem:[%s7] sm:$0x1]
        %v1067 = vlaneseq
        %v1068 = vshrl.u32 %v1067, 7
        %v1069 = vsub.s32 0, %v1068
        %v1070 = vrot.slane %v1065, %v1069
        %v1072 = vadd.f32 %v1063, %v1070
        %v1073 = vadd.f32 %v1064, %v1070
        %1074 = vst [vmem:[%s386] sm:$0xff] %v1072
        %1075 = vst [vmem:[%s386 + $0x8] sm:$0xff] %v1073
        %s1076 = sand.u32 %s215, 1
        %s1077 = scalar_lea.sflag [#allocation4], %s1076
        %s1078 = sand.u32 %s215, 1
        %s1079 = smul.addr %s1078, 16
        %s1080 = scalar_lea.vmem [#allocation10], %s1079
        // Predicated region
        $region69: #{tpu_custom_call.1} parent=51 // pred_check
          %p1081 = pneg %p225
        $region70: #{tpu_custom_call.1} parent=51 // pred_check_branch
          %1083 = sbr.rel (%p1081) target = $region72
        $region71: #{tpu_custom_call.1} parent=51 // pred_region
          %s1085 = ssub.s32 256, 256
          %1086 = vsyncadd %s1077, %s1085
          %s1087 = smul.addr %s29, 2
          %s1088 = smul.addr %s1087, 128
          %s1089 = scalar_lea.hbm %s8, %s1088
          %s1090 = sshll.u32 %s1080, 4
          %s1091 = int_to_ptr.vmem [resolvable:$true] %s1090
          %1096 = dma.vmem_to_hbm [thread:$0]  %s1091, 256, %s1089, %s1077, 128, 128, 8
        $region72: #{tpu_custom_call.1} parent=51 // pred_fallthru
          _
      $region52: #{tpu_custom_call.1} parent=5 // pred_fallthru
        _
      %p1097 = scmp.le.s32.totalorder 2, %s24
      // Predicated region
      $region73: #{tpu_custom_call.1} parent=5 // pred_check
        %p1098 = pneg %p1097
      $region74: #{tpu_custom_call.1} parent=5 // pred_check_branch
        %1100 = sbr.rel (%p1098) target = $region76
      $region75: #{tpu_custom_call.1} parent=5 // pred_region
        %s1101 = ssub.s32 %s24, 2
        // Predicated region
        $region77: #{tpu_custom_call.1} parent=75 // pred_check
          %p1102 = pneg %p231
        $region78: #{tpu_custom_call.1} parent=75 // pred_check_branch
          %1104 = sbr.rel (%p1102) target = $region80
        $region79: #{tpu_custom_call.1} parent=75 // pred_region
          %s1105 = sand.u32 %s216, 1
          %s1106 = scalar_lea.sflag [#allocation4], %s1105
          %s1107 = sand.u32 %s216, 1
          %s1108 = smul.addr %s1107, 16
          %s1109 = scalar_lea.vmem [#allocation10], %s1108
          %1110 = dma.done %s1106, 256
        $region80: #{tpu_custom_call.1} parent=75 // pred_fallthru
          _
      $region76: #{tpu_custom_call.1} parent=5 // pred_fallthru
        _
    $region6: #{tpu_custom_call.1} parent=1 // loop_footer
      %s28 = sadd.s32 1, %s24
    $region7: #{tpu_custom_call.1} parent=1 // loop_footer_branch
      %23 = sbr.rel target = $region3
    $region8: #{tpu_custom_call.1} parent=1 // loop_exit
      _
    %1111 = vsyncpa [#allocation3], 1
    %s1112 = scalar_lea.sflag [#allocation3], 1
    %1113 = vsyncpa %s1112, 1
    %1114 = vsyncpa [#allocation8], 1
    %s1115 = scalar_lea.sflag [#allocation8], 1
    %1116 = vsyncpa %s1115, 1
    %1117 = vsyncpa [#allocation4], 1
    %s1118 = scalar_lea.sflag [#allocation4], 1
    %1119 = vsyncpa %s1118, 1
    %1120 = vsyncpa [#allocation5], 1
    %s1121 = scalar_lea.sflag [#allocation5], 1
    %1122 = vsyncpa %s1121, 1

</llo_original>
